<compile_context>
chip_gen: v5e
topology: v5e:2x2
jax: 0.10.0
libtpu: 0.0.40
codegen_flags: <defaults>
</compile_context>

<pallas_src>
import functools

import jax
import jax.numpy as jnp
from jax.experimental import pallas as pl
from jax.experimental.pallas import tpu as pltpu


def _round_up(v, m):
    return ((v + m - 1) // m) * m


def _vsn_kernel(x_ref, w12_ref, b12_ref, w3_ref, b3_ref, w4_ref, b4_ref, out_ref):
    """One row-tile of the VariableSelectionNetwork forward (eval mode).

    x_ref   : (TM, I)  flattened input rows
    w12/b12 : fused flatten_projection + variable_weights[0]: Linear(I -> H)
    w3/b3   : variable_weights[3]: Linear(H -> I), then Softmax(-1)
    w4/b4   : selected_processing[0]: Linear(I -> H), then ReLU
    out_ref : (TM, H)
    """
    x = x_ref[...]
    xf = x.astype(jnp.float32)

    # h = ReLU(x @ W12 + b12)      (Dropout = identity in eval mode)
    h = jnp.dot(x.astype(w12_ref.dtype), w12_ref[...],
                preferred_element_type=jnp.float32) + b12_ref[...]
    h = jnp.maximum(h, 0.0)

    # variable weights: Linear(H -> I) followed by a stable softmax over I.
    logits = jnp.dot(h.astype(w3_ref.dtype), w3_ref[...],
                     preferred_element_type=jnp.float32) + b3_ref[...]
    m = jnp.max(logits, axis=-1, keepdims=True)
    e = jnp.exp(logits - m)
    denom = jnp.sum(e, axis=-1, keepdims=True)
    # Exact reciprocal: only (TM, 1) values -> negligible cost, tight parity.
    weights = e * pl.reciprocal(denom, approx=False)

    # selected = x * weights ; processed = ReLU(Linear(selected)) (Dropout=id)
    selected = xf * weights
    out = jnp.dot(selected.astype(w4_ref.dtype), w4_ref[...],
                  preferred_element_type=jnp.float32) + b4_ref[...]
    out = jnp.maximum(out, 0.0)

    out_ref[...] = out.astype(out_ref.dtype)


@functools.partial(jax.jit, static_argnames=("tm", "mxu_dtype"))
def variable_selection_network(x, params, *, tm=1024, mxu_dtype=None):
    """Pallas forward for VariableSelectionNetwork.

    x: (B, S, I) or (B, I).  Returns (B, S, H) or (B, 1, H) respectively,
    matching the PyTorch module (2-D input is unsqueezed to seq_len=1).
    mxu_dtype: optionally cast MXU operands (weights + LHS) to e.g. bfloat16
    while accumulating in f32 (recommended on v5e).
    """
    if x.ndim == 2:
        x = x[:, None, :]
    B, S, I = x.shape
    H = params["w1"].shape[1]
    wdt = jnp.dtype(mxu_dtype) if mxu_dtype is not None else jnp.dtype(params["w1"].dtype)

    # ---- parameter preparation (tiny; constant per compile) -----------------
    # Fuse flatten_projection with variable_weights[0] (exact: no activation
    # between them in the module).  Biases stay f32 (added to f32 accumulators).
    w12 = jnp.dot(params["w1"].astype(jnp.float32), params["w2"].astype(jnp.float32))
    b12 = (jnp.dot(params["b1"].astype(jnp.float32), params["w2"].astype(jnp.float32))
           + params["b2"].astype(jnp.float32))
    w12 = w12.astype(wdt)
    w3 = params["w3"].astype(wdt)
    b3 = params["b3"].astype(jnp.float32)
    w4 = params["w4"].astype(wdt)
    b4 = params["b4"].astype(jnp.float32)
    # TODO(synk): if production I is large and not a multiple of 128, pad x /
    # w3 columns / w4 rows to Ip = 128k (with b3 pad = -1e30 so the softmax
    # ignores the pad) to make logits / softmax reductions lane-dense.

    x_flat = x.reshape(B * S, I)
    n = B * S

    # ---- row-tile selection --------------------------------------------------
    # Large tiles amortize per-grid-step overhead on v5e/v6e (single TC); the
    # tile is shrunk so the grid has >= 2 steps (>= 4 once n is large enough)
    # so the "parallel" axis shards row tiles across v7x's two TensorCores.
    n8 = _round_up(n, 8)
    target_steps = 4 if n8 >= 4 * 256 else 2
    tm_eff = min(tm, _round_up(-(-n8 // target_steps), 8))
    grid = (pl.cdiv(n, tm_eff),)

    # ---- VMEM budget / cost estimate -----------------------------------------
    elt = jnp.dtype(x.dtype).itemsize
    weight_bytes = sum(int(a.size) * a.dtype.itemsize
                       for a in (w12, b12, w3, b3, w4, b4))
    io_tile_bytes = tm_eff * (I + H) * elt            # x tile + out tile (per buffer)
    tmp_bytes = tm_eff * (3 * H + 4 * I) * 4          # in-kernel f32 temporaries
    vmem_limit = int(min(max(2 * io_tile_bytes + 2 * weight_bytes + tmp_bytes
                             + (4 << 20), 16 << 20), 32 << 20))

    flops = 2 * n * (I * H + H * I + I * H) + 8 * n * (H + I)
    cost = pl.CostEstimate(
        flops=int(flops),
        transcendentals=int(n * (I + 1)),             # exp + reciprocal per row
        bytes_accessed=int(n * (I + H) * elt + weight_bytes),
    )

    full = lambda a: pl.BlockSpec(a.shape, lambda i: (0,) * a.ndim)

    out_flat = pl.pallas_call(
        _vsn_kernel,
        out_shape=jax.ShapeDtypeStruct((n, H), x.dtype),
        grid_spec=pltpu.PrefetchScalarGridSpec(
            num_scalar_prefetch=0,
            grid=grid,
            in_specs=[
                pl.BlockSpec((tm_eff, I), lambda i: (i, 0)),   # streamed rows
                full(w12), full(b12),
                full(w3), full(b3),
                full(w4), full(b4),
            ],
            out_specs=pl.BlockSpec((tm_eff, H), lambda i: (i, 0)),
        ),
        compiler_params=pltpu.CompilerParams(
            dimension_semantics=("parallel",),
            vmem_limit_bytes=vmem_limit),
        cost_estimate=cost,
    )(x_flat, w12, b12, w3, b3, w4, b4)

    return out_flat.reshape(B, S, H)


def init_params(key, input_dim, hidden_dim, dtype=jnp.float32):
    """Deterministic init mimicking torch.nn.Linear (U(-1/sqrt(fan_in), +))."""
    def linear(k, fan_in, fan_out):
        kw, kb = jax.random.split(k)
        bound = 1.0 / jnp.sqrt(fan_in)
        w = jax.random.uniform(kw, (fan_in, fan_out), dtype, -bound, bound)
        b = jax.random.uniform(kb, (1, fan_out), dtype, -bound, bound)
        return w, b

    k1, k2, k3, k4 = jax.random.split(key, 4)
    w1, b1 = linear(k1, input_dim, hidden_dim)   # flatten_projection
    w2, b2 = linear(k2, hidden_dim, hidden_dim)  # variable_weights Linear 1
    w3, b3 = linear(k3, hidden_dim, input_dim)   # variable_weights Linear 2
    w4, b4 = linear(k4, input_dim, hidden_dim)   # selected_processing Linear
    return dict(w1=w1, b1=b1, w2=w2, b2=b2, w3=w3, b3=b3, w4=w4, b4=b4)


def _reference(x, p):
    """Pure-JAX reference of the PyTorch forward (eval mode)."""
    if x.ndim == 2:
        x = x[:, None, :]
    B, S, I = x.shape
    xf = x.reshape(-1, I)
    proj = xf @ p["w1"] + p["b1"]
    h = jnp.maximum(proj @ p["w2"] + p["b2"], 0.0)
    logits = h @ p["w3"] + p["b3"]
    w = jax.nn.softmax(logits, axis=-1)
    sel = xf * w
    out = jnp.maximum(sel @ p["w4"] + p["b4"], 0.0)
    return out.reshape(B, S, -1)


if __name__ == "__main__":
    key = jax.random.PRNGKey(0)
    k_x, k_p, k_x2 = jax.random.split(key, 3)

    batch, seq_len, input_dim, hidden_dim = 2, 8, 4, 32
    x = jax.random.normal(k_x, (batch, seq_len, input_dim), jnp.float32)
    params = init_params(k_p, input_dim, hidden_dim)

    out = jax.block_until_ready(variable_selection_network(x, params))
    ref = _reference(x, params)
    assert out.shape == (batch, seq_len, hidden_dim), out.shape
    assert jnp.allclose(out, ref, atol=1e-3, rtol=1e-3), \
        float(jnp.max(jnp.abs(out - ref)))

    # Ragged row count + 2-D input path (exercises the partial last block,
    # i.e. the "no wrapper-side padding" change).
    x2 = jax.random.normal(k_x2, (5, input_dim), jnp.float32)
    out2 = jax.block_until_ready(variable_selection_network(x2, params))
    ref2 = _reference(x2, params)
    assert out2.shape == (5, 1, hidden_dim), out2.shape
    assert jnp.allclose(out2, ref2, atol=1e-3, rtol=1e-3), \
        float(jnp.max(jnp.abs(out2 - ref2)))

    print("KERNEL_OK")
</pallas_src>

<mosaic_0001>
module attributes {stable_mosaic.version = 11 : i64} {
  func.func @_vsn_kernel(%arg0: i32, %arg1: memref<8x4xf32, #tpu.memory_space<vmem>>, %arg2: memref<4x32xf32, #tpu.memory_space<vmem>>, %arg3: memref<1x32xf32, #tpu.memory_space<vmem>>, %arg4: memref<32x4xf32, #tpu.memory_space<vmem>>, %arg5: memref<1x4xf32, #tpu.memory_space<vmem>>, %arg6: memref<4x32xf32, #tpu.memory_space<vmem>>, %arg7: memref<1x32xf32, #tpu.memory_space<vmem>>, %arg8: memref<8x32xf32, #tpu.memory_space<vmem>>) attributes {dimension_semantics = [#tpu.dimension_semantics<parallel>], iteration_bounds = array<i64: 2>, scalar_prefetch = 0 : i64, scratch_operands = 0 : i64, tpu.core_type = #tpu.core_type<tc>, window_params = [{transform_indices = @transform_0, window_bounds = array<i64: 8, 4>}, {pipeline_mode = #tpu.pipeline_mode<synchronous>, transform_indices = @transform_1, window_bounds = array<i64: 4, 32>}, {pipeline_mode = #tpu.pipeline_mode<synchronous>, transform_indices = @transform_2, window_bounds = array<i64: 1, 32>}, {pipeline_mode = #tpu.pipeline_mode<synchronous>, transform_indices = @transform_3, window_bounds = array<i64: 32, 4>}, {pipeline_mode = #tpu.pipeline_mode<synchronous>, transform_indices = @transform_4, window_bounds = array<i64: 1, 4>}, {pipeline_mode = #tpu.pipeline_mode<synchronous>, transform_indices = @transform_5, window_bounds = array<i64: 4, 32>}, {pipeline_mode = #tpu.pipeline_mode<synchronous>, transform_indices = @transform_6, window_bounds = array<i64: 1, 32>}, {transform_indices = @transform_7, window_bounds = array<i64: 8, 32>}]} {
    %c0 = arith.constant 0 : index
    %c0_0 = arith.constant 0 : index
    %0 = vector.load %arg1[%c0, %c0_0] : memref<8x4xf32, #tpu.memory_space<vmem>>, vector<8x4xf32>
    %c0_1 = arith.constant 0 : index
    %c0_2 = arith.constant 0 : index
    %1 = vector.load %arg2[%c0_1, %c0_2] : memref<4x32xf32, #tpu.memory_space<vmem>>, vector<4x32xf32>
    %cst = arith.constant dense<0.000000e+00> : vector<8x32xf32>
    %2 = tpu.matmul %0, %1, %cst {dimension_numbers = #tpu.dot_dimension_numbers<[1], [0], [0], [1], [0, 0, 1, 1], [], []>} : vector<8x4xf32>, vector<4x32xf32>, vector<8x32xf32> -> vector<8x32xf32>
    %c0_3 = arith.constant 0 : index
    %c0_4 = arith.constant 0 : index
    %3 = vector.load %arg3[%c0_3, %c0_4] : memref<1x32xf32, #tpu.memory_space<vmem>>, vector<1x32xf32>
    %4 = vector.broadcast %3 : vector<1x32xf32> to vector<8x32xf32>
    %5 = arith.addf %2, %4 : vector<8x32xf32>
    %cst_5 = arith.constant 0.000000e+00 : f32
    %6 = vector.broadcast %cst_5 : f32 to vector<8x32xf32>
    %7 = arith.maximumf %5, %6 : vector<8x32xf32>
    %c0_6 = arith.constant 0 : index
    %c0_7 = arith.constant 0 : index
    %8 = vector.load %arg4[%c0_6, %c0_7] : memref<32x4xf32, #tpu.memory_space<vmem>>, vector<32x4xf32>
    %cst_8 = arith.constant dense<0.000000e+00> : vector<8x4xf32>
    %9 = tpu.matmul %7, %8, %cst_8 {dimension_numbers = #tpu.dot_dimension_numbers<[1], [0], [0], [1], [0, 0, 1, 1], [], []>} : vector<8x32xf32>, vector<32x4xf32>, vector<8x4xf32> -> vector<8x4xf32>
    %c0_9 = arith.constant 0 : index
    %c0_10 = arith.constant 0 : index
    %10 = vector.load %arg5[%c0_9, %c0_10] : memref<1x4xf32, #tpu.memory_space<vmem>>, vector<1x4xf32>
    %11 = vector.broadcast %10 : vector<1x4xf32> to vector<8x4xf32>
    %12 = arith.addf %9, %11 : vector<8x4xf32>
    %cst_11 = arith.constant dense<0xFF800000> : vector<8xf32>
    %13 = vector.multi_reduction <maximumf>, %12, %cst_11 [1] : vector<8x4xf32> to vector<8xf32>
    %14 = vector.shape_cast %13 : vector<8xf32> to vector<8x1xf32>
    %15 = vector.broadcast %14 : vector<8x1xf32> to vector<8x4xf32>
    %16 = arith.subf %12, %15 : vector<8x4xf32>
    %17 = math.exp %16 : vector<8x4xf32>
    %cst_12 = arith.constant dense<0.000000e+00> : vector<8xf32>
    %18 = vector.multi_reduction <add>, %17, %cst_12 [1] : vector<8x4xf32> to vector<8xf32>
    %19 = vector.shape_cast %18 : vector<8xf32> to vector<8x1xf32>
    %20 = tpu.reciprocal %19 : vector<8x1xf32> -> vector<8x1xf32>
    %21 = vector.broadcast %20 : vector<8x1xf32> to vector<8x4xf32>
    %22 = arith.mulf %17, %21 : vector<8x4xf32>
    %23 = arith.mulf %0, %22 : vector<8x4xf32>
    %c0_13 = arith.constant 0 : index
    %c0_14 = arith.constant 0 : index
    %24 = vector.load %arg6[%c0_13, %c0_14] : memref<4x32xf32, #tpu.memory_space<vmem>>, vector<4x32xf32>
    %cst_15 = arith.constant dense<0.000000e+00> : vector<8x32xf32>
    %25 = tpu.matmul %23, %24, %cst_15 {dimension_numbers = #tpu.dot_dimension_numbers<[1], [0], [0], [1], [0, 0, 1, 1], [], []>} : vector<8x4xf32>, vector<4x32xf32>, vector<8x32xf32> -> vector<8x32xf32>
    %c0_16 = arith.constant 0 : index
    %c0_17 = arith.constant 0 : index
    %26 = vector.load %arg7[%c0_16, %c0_17] : memref<1x32xf32, #tpu.memory_space<vmem>>, vector<1x32xf32>
    %27 = vector.broadcast %26 : vector<1x32xf32> to vector<8x32xf32>
    %28 = arith.addf %25, %27 : vector<8x32xf32>
    %cst_18 = arith.constant 0.000000e+00 : f32
    %29 = vector.broadcast %cst_18 : f32 to vector<8x32xf32>
    %30 = arith.maximumf %28, %29 : vector<8x32xf32>
    %c0_19 = arith.constant 0 : index
    %c0_20 = arith.constant 0 : index
    %31 = vector.load %arg8[%c0_19, %c0_20] : memref<8x32xf32, #tpu.memory_space<vmem>>, vector<8x32xf32>
    tpu.vector_store %arg8[%c0_19, %c0_20], %30 {strides = array<i32>} : memref<8x32xf32, #tpu.memory_space<vmem>>, vector<8x32xf32>,
    return
  }
  func.func @transform_0(%arg0: i32) -> (i32, i32) {
    %c0_i32 = arith.constant 0 : i32
    %c0_i32_0 = arith.constant 0 : i32
    return %arg0, %c0_i32 : i32, i32
  }
  func.func @transform_1(%arg0: i32) -> (i32, i32) {
    %c0_i32 = arith.constant 0 : i32
    %c0_i32_0 = arith.constant 0 : i32
    %c0_i32_1 = arith.constant 0 : i32
    return %c0_i32, %c0_i32_0 : i32, i32
  }
  func.func @transform_2(%arg0: i32) -> (i32, i32) {
    %c0_i32 = arith.constant 0 : i32
    %c0_i32_0 = arith.constant 0 : i32
    %c0_i32_1 = arith.constant 0 : i32
    return %c0_i32, %c0_i32_0 : i32, i32
  }
  func.func @transform_3(%arg0: i32) -> (i32, i32) {
    %c0_i32 = arith.constant 0 : i32
    %c0_i32_0 = arith.constant 0 : i32
    %c0_i32_1 = arith.constant 0 : i32
    return %c0_i32, %c0_i32_0 : i32, i32
  }
  func.func @transform_4(%arg0: i32) -> (i32, i32) {
    %c0_i32 = arith.constant 0 : i32
    %c0_i32_0 = arith.constant 0 : i32
    %c0_i32_1 = arith.constant 0 : i32
    return %c0_i32, %c0_i32_0 : i32, i32
  }
  func.func @transform_5(%arg0: i32) -> (i32, i32) {
    %c0_i32 = arith.constant 0 : i32
    %c0_i32_0 = arith.constant 0 : i32
    %c0_i32_1 = arith.constant 0 : i32
    return %c0_i32, %c0_i32_0 : i32, i32
  }
  func.func @transform_6(%arg0: i32) -> (i32, i32) {
    %c0_i32 = arith.constant 0 : i32
    %c0_i32_0 = arith.constant 0 : i32
    %c0_i32_1 = arith.constant 0 : i32
    return %c0_i32, %c0_i32_0 : i32, i32
  }
  func.func @transform_7(%arg0: i32) -> (i32, i32) {
    %c0_i32 = arith.constant 0 : i32
    %c0_i32_0 = arith.constant 0 : i32
    return %arg0, %c0_i32 : i32, i32
  }
}

</mosaic_0001>

<llo_original>
// kernel: variable_selection_network.1
$region0: #{variable_selection_network.1}
  #allocation0 [shape = 'u32[]', space=smem, size = 0x4, offset = 0x4, fixed_abs, tag = 'smem constant byte address 0x4 - core index']
  #allocation1 [shape = 'u32[72,128]{1,0:T(1,128)}', space=vmem, size = 0x9000, scoped, tag = 'internal scratch']
  %s0 = inlined_call_operand.vmem [shape: f32[16,4], index: 0, kind: input, shape index: {}]
  %s1 = inlined_call_operand.vmem [shape: f32[4,32], index: 1, kind: input, shape index: {}]
  %s2 = inlined_call_operand.vmem [shape: f32[1,32], index: 2, kind: input, shape index: {}]
  %s3 = inlined_call_operand.vmem [shape: f32[32,4], index: 3, kind: input, shape index: {}]
  %s4 = inlined_call_operand.vmem [shape: f32[1,4], index: 4, kind: input, shape index: {}]
  %s5 = inlined_call_operand.vmem [shape: f32[4,32], index: 5, kind: input, shape index: {}]
  %s6 = inlined_call_operand.vmem [shape: f32[1,32], index: 6, kind: input, shape index: {}]
  %s7 = inlined_call_operand.hbm [shape: f32[16,32], index: 7, kind: output, shape index: {}]
  %s8 = sld [smem:[#allocation0]]
  $region61: #{variable_selection_network.1} parent=0
    _
  %s10 = ssub.s32 1, %s8
  %s11 = scalar_select 0, %s10, %s8
  $region1: #{variable_selection_network.1} parent=0
    #allocation2 [shape = 'u8[8192]{0}', space=vmem, size = 0x2000, scoped, tag = 'output window, operand 0']
    #allocation3 [shape = 's32[2]{0}', space=sflag, size = 0x8, scoped, tag = 'scoped memory for variable_selection_network.1']
    %12 = vsyncpa [#allocation3], 0
    %s13 = scalar_lea.sflag [#allocation3], 1
    %14 = vsyncpa %s13, 0
    loop: start=0, step=1, limit=4
    $region2: #{variable_selection_network.1} parent=1 // loop_pre_header
      _
    $region3: #{variable_selection_network.1} parent=1 // loop_header
      %s16 = sphi 0, %s20
      %p17 = scmp.ge.s32.totalorder %s16, 4
      %s26 = sphi 0, %s28
      %s29 = sphi 0, %s26
      %s30 = sphi 0, %s29
      %s46 = sphi 0, %s30
      %s50 = sphi 0, %s50
      %s52 = sphi 0, %s50
      %s53 = sphi 0, %s52
      %s67 = sphi 0, %s53
      %s71 = sphi 0, %s71
      %s73 = sphi 0, %s71
      %s74 = sphi 0, %s73
      %s88 = sphi 0, %s74
      %s92 = sphi 0, %s92
      %s94 = sphi 0, %s92
      %s95 = sphi 0, %s94
      %s109 = sphi 0, %s95
      %s113 = sphi 0, %s113
      %s115 = sphi 0, %s113
      %s116 = sphi 0, %s115
      %s130 = sphi 0, %s116
      %s134 = sphi 0, %s134
      %s136 = sphi 0, %s134
      %s137 = sphi 0, %s136
      %s151 = sphi 0, %s137
      %s155 = sphi 0, %s155
      %s157 = sphi 0, %s155
      %s158 = sphi 0, %s157
      %s172 = sphi 0, %s158
      %s178 = sphi 0, %s180
      %s181 = sphi 0, %s178
      %s182 = sphi 0, %s181
      %s198 = sphi 0, %s182
    $region4: #{variable_selection_network.1} parent=1 // loop_header_branch
      %19 = sbr.rel (%p17) target = $region8
    $region5: #{variable_selection_network.1} parent=1 // loop_body
      %s21 = ssub.s32 %s16, 1
      %s22 = ssub.s32 %s16, 2
      %s23 = sadd.s32 %s16, 1
      %s24 = ssub.s32 %s16, %s23
      %p25 = scmp.eq.s32.totalorder %s24, 0
      %s27 = sadd.s32 %s26, 1
      %s28 = scalar_select %p25, %s26, %s27
      %p31 = pneg %p25
      %p32 = scmp.eq.s32.totalorder %s16, 1
      %p33 = por %p31, %p32
      %p34 = scmp.ne.s32.totalorder %s26, %s29
      %p35 = scmp.eq.s32.totalorder %s16, 0
      %p36 = por %p34, %p35
      %p37 = scmp.ne.s32.totalorder %s26, %s29
      %p38 = scmp.eq.s32.totalorder %s21, 1
      %p39 = por %p37, %p38
      %p40 = scmp.ne.s32.totalorder %s29, %s30
      %p41 = scmp.eq.s32.totalorder %s21, 0
      %p42 = por %p40, %p41
      %p43 = scmp.ne.s32.totalorder %s29, %s30
      %p44 = scmp.eq.s32.totalorder %s22, 1
      %p45 = por %p43, %p44
      %p47 = scmp.ne.s32.totalorder %s30, %s46
      %p48 = scmp.eq.s32.totalorder %s22, 0
      %p49 = por %p47, %p48
      %s51 = sadd.s32 %s50, 1
      %p54 = scmp.eq.s32.totalorder %s16, 1
      %p55 = scmp.ne.s32.totalorder %s50, %s52
      %p56 = scmp.eq.s32.totalorder %s16, 0
      %p57 = por %p55, %p56
      %p58 = scmp.ne.s32.totalorder %s50, %s52
      %p59 = scmp.eq.s32.totalorder %s21, 1
      %p60 = por %p58, %p59
      %p61 = scmp.ne.s32.totalorder %s52, %s53
      %p62 = scmp.eq.s32.totalorder %s21, 0
      %p63 = por %p61, %p62
      %p64 = scmp.ne.s32.totalorder %s52, %s53
      %p65 = scmp.eq.s32.totalorder %s22, 1
      %p66 = por %p64, %p65
      %p68 = scmp.ne.s32.totalorder %s53, %s67
      %p69 = scmp.eq.s32.totalorder %s22, 0
      %p70 = por %p68, %p69
      %s72 = sadd.s32 %s71, 1
      %p75 = scmp.eq.s32.totalorder %s16, 1
      %p76 = scmp.ne.s32.totalorder %s71, %s73
      %p77 = scmp.eq.s32.totalorder %s16, 0
      %p78 = por %p76, %p77
      %p79 = scmp.ne.s32.totalorder %s71, %s73
      %p80 = scmp.eq.s32.totalorder %s21, 1
      %p81 = por %p79, %p80
      %p82 = scmp.ne.s32.totalorder %s73, %s74
      %p83 = scmp.eq.s32.totalorder %s21, 0
      %p84 = por %p82, %p83
      %p85 = scmp.ne.s32.totalorder %s73, %s74
      %p86 = scmp.eq.s32.totalorder %s22, 1
      %p87 = por %p85, %p86
      %p89 = scmp.ne.s32.totalorder %s74, %s88
      %p90 = scmp.eq.s32.totalorder %s22, 0
      %p91 = por %p89, %p90
      %s93 = sadd.s32 %s92, 1
      %p96 = scmp.eq.s32.totalorder %s16, 1
      %p97 = scmp.ne.s32.totalorder %s92, %s94
      %p98 = scmp.eq.s32.totalorder %s16, 0
      %p99 = por %p97, %p98
      %p100 = scmp.ne.s32.totalorder %s92, %s94
      %p101 = scmp.eq.s32.totalorder %s21, 1
      %p102 = por %p100, %p101
      %p103 = scmp.ne.s32.totalorder %s94, %s95
      %p104 = scmp.eq.s32.totalorder %s21, 0
      %p105 = por %p103, %p104
      %p106 = scmp.ne.s32.totalorder %s94, %s95
      %p107 = scmp.eq.s32.totalorder %s22, 1
      %p108 = por %p106, %p107
      %p110 = scmp.ne.s32.totalorder %s95, %s109
      %p111 = scmp.eq.s32.totalorder %s22, 0
      %p112 = por %p110, %p111
      %s114 = sadd.s32 %s113, 1
      %p117 = scmp.eq.s32.totalorder %s16, 1
      %p118 = scmp.ne.s32.totalorder %s113, %s115
      %p119 = scmp.eq.s32.totalorder %s16, 0
      %p120 = por %p118, %p119
      %p121 = scmp.ne.s32.totalorder %s113, %s115
      %p122 = scmp.eq.s32.totalorder %s21, 1
      %p123 = por %p121, %p122
      %p124 = scmp.ne.s32.totalorder %s115, %s116
      %p125 = scmp.eq.s32.totalorder %s21, 0
      %p126 = por %p124, %p125
      %p127 = scmp.ne.s32.totalorder %s115, %s116
      %p128 = scmp.eq.s32.totalorder %s22, 1
      %p129 = por %p127, %p128
      %p131 = scmp.ne.s32.totalorder %s116, %s130
      %p132 = scmp.eq.s32.totalorder %s22, 0
      %p133 = por %p131, %p132
      %s135 = sadd.s32 %s134, 1
      %p138 = scmp.eq.s32.totalorder %s16, 1
      %p139 = scmp.ne.s32.totalorder %s134, %s136
      %p140 = scmp.eq.s32.totalorder %s16, 0
      %p141 = por %p139, %p140
      %p142 = scmp.ne.s32.totalorder %s134, %s136
      %p143 = scmp.eq.s32.totalorder %s21, 1
      %p144 = por %p142, %p143
      %p145 = scmp.ne.s32.totalorder %s136, %s137
      %p146 = scmp.eq.s32.totalorder %s21, 0
      %p147 = por %p145, %p146
      %p148 = scmp.ne.s32.totalorder %s136, %s137
      %p149 = scmp.eq.s32.totalorder %s22, 1
      %p150 = por %p148, %p149
      %p152 = scmp.ne.s32.totalorder %s137, %s151
      %p153 = scmp.eq.s32.totalorder %s22, 0
      %p154 = por %p152, %p153
      %s156 = sadd.s32 %s155, 1
      %p159 = scmp.eq.s32.totalorder %s16, 1
      %p160 = scmp.ne.s32.totalorder %s155, %s157
      %p161 = scmp.eq.s32.totalorder %s16, 0
      %p162 = por %p160, %p161
      %p163 = scmp.ne.s32.totalorder %s155, %s157
      %p164 = scmp.eq.s32.totalorder %s21, 1
      %p165 = por %p163, %p164
      %p166 = scmp.ne.s32.totalorder %s157, %s158
      %p167 = scmp.eq.s32.totalorder %s21, 0
      %p168 = por %p166, %p167
      %p169 = scmp.ne.s32.totalorder %s157, %s158
      %p170 = scmp.eq.s32.totalorder %s22, 1
      %p171 = por %p169, %p170
      %p173 = scmp.ne.s32.totalorder %s158, %s172
      %p174 = scmp.eq.s32.totalorder %s22, 0
      %p175 = por %p173, %p174
      %s176 = ssub.s32 %s16, %s23
      %p177 = scmp.eq.s32.totalorder %s176, 0
      %s179 = sadd.s32 %s178, 1
      %s180 = scalar_select %p177, %s178, %s179
      %p183 = pneg %p177
      %p184 = scmp.eq.s32.totalorder %s16, 1
      %p185 = por %p183, %p184
      %p186 = scmp.ne.s32.totalorder %s178, %s181
      %p187 = scmp.eq.s32.totalorder %s16, 0
      %p188 = por %p186, %p187
      %p189 = scmp.ne.s32.totalorder %s178, %s181
      %p190 = scmp.eq.s32.totalorder %s21, 1
      %p191 = por %p189, %p190
      %p192 = scmp.ne.s32.totalorder %s181, %s182
      %p193 = scmp.eq.s32.totalorder %s21, 0
      %p194 = por %p192, %p193
      %p195 = scmp.ne.s32.totalorder %s181, %s182
      %p196 = scmp.eq.s32.totalorder %s22, 1
      %p197 = por %p195, %p196
      %p199 = scmp.ne.s32.totalorder %s182, %s198
      %p200 = scmp.eq.s32.totalorder %s22, 0
      %p201 = por %p199, %p200
      %p202 = scmp.le.s32.totalorder 1, %s16
      %p203 = scmp.lt.s32.totalorder %s16, 3
      %p204 = pnand %p202, %p203
      %p205 = pneg %p204
      // Predicated region
      $region9: #{variable_selection_network.1} parent=5 // pred_check
        _
      $region10: #{variable_selection_network.1} parent=5 // pred_check_branch
        %207 = sbr.rel (%p204) target = $region12
      $region11: #{variable_selection_network.1} parent=5 // pred_region
        %s208 = ssub.s32 %s16, 1
        // Predicated region
        $region13: #{variable_selection_network.1} parent=11 // pred_check
          %p209 = pneg %p63
        $region14: #{variable_selection_network.1} parent=11 // pred_check_branch
          %211 = sbr.rel (%p209) target = $region16
        $region15: #{variable_selection_network.1} parent=11 // pred_region
          _
        $region16: #{variable_selection_network.1} parent=11 // pred_fallthru
          _
        // Predicated region
        $region17: #{variable_selection_network.1} parent=11 // pred_check
          %p212 = pneg %p84
        $region18: #{variable_selection_network.1} parent=11 // pred_check_branch
          %214 = sbr.rel (%p212) target = $region20
        $region19: #{variable_selection_network.1} parent=11 // pred_region
          _
        $region20: #{variable_selection_network.1} parent=11 // pred_fallthru
          _
        // Predicated region
        $region21: #{variable_selection_network.1} parent=11 // pred_check
          %p215 = pneg %p105
        $region22: #{variable_selection_network.1} parent=11 // pred_check_branch
          %217 = sbr.rel (%p215) target = $region24
        $region23: #{variable_selection_network.1} parent=11 // pred_region
          _
        $region24: #{variable_selection_network.1} parent=11 // pred_fallthru
          _
        // Predicated region
        $region25: #{variable_selection_network.1} parent=11 // pred_check
          %p218 = pneg %p126
        $region26: #{variable_selection_network.1} parent=11 // pred_check_branch
          %220 = sbr.rel (%p218) target = $region28
        $region27: #{variable_selection_network.1} parent=11 // pred_region
          _
        $region28: #{variable_selection_network.1} parent=11 // pred_fallthru
          _
        // Predicated region
        $region29: #{variable_selection_network.1} parent=11 // pred_check
          %p221 = pneg %p147
        $region30: #{variable_selection_network.1} parent=11 // pred_check_branch
          %223 = sbr.rel (%p221) target = $region32
        $region31: #{variable_selection_network.1} parent=11 // pred_region
          _
        $region32: #{variable_selection_network.1} parent=11 // pred_fallthru
          _
        // Predicated region
        $region33: #{variable_selection_network.1} parent=11 // pred_check
          %p224 = pneg %p168
        $region34: #{variable_selection_network.1} parent=11 // pred_check_branch
          %226 = sbr.rel (%p224) target = $region36
        $region35: #{variable_selection_network.1} parent=11 // pred_region
          _
        $region36: #{variable_selection_network.1} parent=11 // pred_fallthru
          _
      $region12: #{variable_selection_network.1} parent=5 // pred_fallthru
        _
      %p227 = scmp.lt.s32.totalorder %s16, 2
      // Predicated region
      $region37: #{variable_selection_network.1} parent=5 // pred_check
        %p228 = pneg %p227
      $region38: #{variable_selection_network.1} parent=5 // pred_check_branch
        %230 = sbr.rel (%p228) target = $region40
      $region39: #{variable_selection_network.1} parent=5 // pred_region
        // Predicated region
        $region41: #{variable_selection_network.1} parent=39 // pred_check
          %p231 = pneg %p36
        $region42: #{variable_selection_network.1} parent=39 // pred_check_branch
          %233 = sbr.rel (%p231) target = $region44
        $region43: #{variable_selection_network.1} parent=39 // pred_region
          %p234 = scmp.lt.s32.totalorder %s16, 1
          %s235 = scalar_select %p234, %s16, 1
          %s236 = smul.addr %s235, 8
          %s237 = scalar_lea.vmem %s0, %s236
        $region44: #{variable_selection_network.1} parent=39 // pred_fallthru
          _
      $region40: #{variable_selection_network.1} parent=5 // pred_fallthru
        _
      %p238 = scmp.le.s32.totalorder 1, %s16
      %p239 = scmp.lt.s32.totalorder %s16, 3
      %p240 = pnand %p238, %p239
      %p241 = pneg %p240
      // Predicated region
      $region45: #{variable_selection_network.1} parent=5 // pred_check
        _
      $region46: #{variable_selection_network.1} parent=5 // pred_check_branch
        %243 = sbr.rel (%p240) target = $region48
      $region47: #{variable_selection_network.1} parent=5 // pred_region
        %s244 = ssub.s32 %s16, 1
        %p245 = scmp.lt.s32.totalorder %s21, 1
        %s246 = scalar_select %p245, %s21, 1
        %s247 = smul.addr %s246, 8
        %s248 = scalar_lea.vmem %s0, %s247
        %p249 = pneg %p42
        %p250 = pneg %p39
        %p251 = pneg %p63
        %p252 = pneg %p60
        %p253 = pneg %p84
        %p254 = pneg %p81
        %p255 = pneg %p105
        %p256 = pneg %p102
        %p257 = pneg %p126
        %p258 = pneg %p123
        %p259 = pneg %p147
        %p260 = pneg %p144
        %p261 = pneg %p168
        %p262 = pneg %p165
        %p263 = pneg %p194
        %p264 = pneg %p191
        %s265 = sand.u32 %s181, 1
        %s266 = scalar_lea.sflag [#allocation3], %s265
        %s267 = sand.u32 %s181, 1
        %s268 = smul.addr %s267, 8
        %s269 = scalar_lea.vmem [#allocation2], %s268
        %p270 = scmp.lt.s32.totalorder %s21, 1
        %s271 = scalar_select %p270, %s21, 1
        %s272 = smul.addr %s271, 8
        %s273 = scalar_lea.vmem %s0, %s272
        %v274 = vld [vmem:[%s273] sm:$0xff]
        %v275 = vld [vmem:[%s1] sm:$0xf]
        %v276 = vld [vmem:[%s2] sm:$0x1]
        %v278 = vperm.slane %v276, 0
        %vm280 = vcmask 31744
        %v282 = vsel %vm280, %v274, 0
        %vm284 = vcmask 1043456
        %v286 = vsel %vm284, %v275, 0
        %288 = vmatpush.msra.mxu0 0.0
        %289 = vmatpush.msra.mxu0 0.0
        %290 = vmatpush.msra.mxu0 0.0
        %291 = vmatpush.msra.mxu0 0.0
        %292 = vmatpush.msra.mxu0 0.0
        %293 = vmatpush.msra.mxu0 0.0
        %294 = vmatpush.msra.mxu0 0.0
        %295 = vmatpush.msra.mxu0 0.0
        %296 = vmatpush.msra.mxu0 0.0
        %297 = vmatpush.msra.mxu0 0.0
        %298 = vmatpush.msra.mxu0 0.0
        %299 = vmatpush.msra.mxu0 0.0
        %300 = vmatpush.msra.mxu0 0.0
        %301 = vmatpush.msra.mxu0 0.0
        %302 = vmatpush.msra.mxu0 0.0
        %303 = vmatpush.msra.mxu0 %v286
        %304 = vmatmul.f32.gmra.mxu0 %v282
        %v305 = vpop.f32.mrf.mxu0
        %v306 = vadd.f32 %v278, %v305
        %307 = vdwg.mxu0
        %v308 = vmax.f32 %v306, 0.0
        %v309 = vld [vmem:[%s3] sm:$0xff]
        %v310 = vld [vmem:[%s3 + $0x8] sm:$0xff]
        %v311 = vld [vmem:[%s3 + $0x10] sm:$0xff]
        %v312 = vld [vmem:[%s3 + $0x18] sm:$0xff]
        %v313 = vld [vmem:[%s4] sm:$0x1]
        %v315 = vperm.slane %v313, 0
        %vm317 = vcmask 261120
        %v319 = vsel %vm317, %v308, 0
        %321 = vmatpush.msra.mxu0 0.0
        %322 = vmatpush.msra.mxu0 0.0
        %323 = vmatpush.msra.mxu0 0.0
        %324 = vmatpush.msra.mxu0 0.0
        %325 = vmatpush.msra.mxu0 0.0
        %326 = vmatpush.msra.mxu0 0.0
        %327 = vmatpush.msra.mxu0 0.0
        %328 = vmatpush.msra.mxu0 0.0
        %329 = vmatpush.msra.mxu0 0.0
        %330 = vmatpush.msra.mxu0 0.0
        %331 = vmatpush.msra.mxu0 0.0
        %332 = vmatpush.msra.mxu0 0.0
        %333 = vmatpush.msra.mxu0 %v312
        %334 = vmatpush.msra.mxu0 %v311
        %335 = vmatpush.msra.mxu0 %v310
        %336 = vmatpush.msra.mxu0 %v309
        %337 = vmatmul.f32.gmra.mxu0 %v319
        %v338 = vpop.f32.mrf.mxu0
        %v339 = vadd.f32 %v315, %v338
        %340 = vdwg.mxu0
        %v341 = vsel %vm280, %v339, -inf
        %342 = vmax.xlane.f32.xlu0 %v341
        %v343 = vpop.xlane.xlu0 %342
        %v344 = vsub.f32 %v339, %v343
        %v345 = vmul.f32 %v344, 1.442695
        %v346 = vpow.pop %v345
        %v347 = vsel %vm280, %v346, 0.0
        %348 = vadd.xlane.f32.xlu0 %v347
        %v349 = vpop.xlane.xlu0 %348
        %v350 = vrcp.pop %v349
        %v351 = vmul.f32 %v349, %v350
        %v352 = vsub.f32 1.0, %v351
        %v353 = vmul.f32 %v350, %v352
        %v354 = vadd.f32 %v350, %v353
        %vm355 = vweird.f32 %v349
        %vm356 = vweird.f32 %v350
        %vm357 = vmor %vm355, %vm356
        %v358 = vsel %vm357, %v350, %v354
        %v359 = vand.u32 2147483647, %v349
        %vm360 = vcmp.eq.f32.partialorder %v359, 8.507059e+37
        %v361 = vand.u32 %v349, 2147483648
        %v362 = vor.u32 1.1754944e-38, %v361
        %v363 = vsel %vm360, %v362, %v358
        %v364 = vmul.f32 %v346, %v363
        %v365 = vmul.f32 %v274, %v364
        %v366 = vld [vmem:[%s5] sm:$0xf]
        %v367 = vld [vmem:[%s6] sm:$0x1]
        %v369 = vperm.slane %v367, 0
        %v372 = vsel %vm280, %v365, 0
        %v375 = vsel %vm284, %v366, 0
        %377 = vmatpush.msra.mxu0 0.0
        %378 = vmatpush.msra.mxu0 0.0
        %379 = vmatpush.msra.mxu0 0.0
        %380 = vmatpush.msra.mxu0 0.0
        %381 = vmatpush.msra.mxu0 0.0
        %382 = vmatpush.msra.mxu0 0.0
        %383 = vmatpush.msra.mxu0 0.0
        %384 = vmatpush.msra.mxu0 0.0
        %385 = vmatpush.msra.mxu0 0.0
        %386 = vmatpush.msra.mxu0 0.0
        %387 = vmatpush.msra.mxu0 0.0
        %388 = vmatpush.msra.mxu0 0.0
        %389 = vmatpush.msra.mxu0 0.0
        %390 = vmatpush.msra.mxu0 0.0
        %391 = vmatpush.msra.mxu0 0.0
        %392 = vmatpush.msra.mxu0 %v375
        %393 = vmatmul.f32.gmra.mxu0 %v372
        %v394 = vpop.f32.mrf.mxu0
        %v395 = vadd.f32 %v369, %v394
        %396 = vdwg.mxu0
        %v397 = vmax.f32 %v395, 0.0
        %398 = vst.msk [vmem:[%s269] sm:$0xff] %vm317, %v397
        %s399 = sand.u32 %s181, 1
        %s400 = scalar_lea.sflag [#allocation3], %s399
        %s401 = sand.u32 %s181, 1
        %s402 = smul.addr %s401, 8
        %s403 = scalar_lea.vmem [#allocation2], %s402
        // Predicated region
        $region49: #{variable_selection_network.1} parent=47 // pred_check
          %p404 = pneg %p191
        $region50: #{variable_selection_network.1} parent=47 // pred_check_branch
          %406 = sbr.rel (%p404) target = $region52
        $region51: #{variable_selection_network.1} parent=47 // pred_region
          %408 = vsyncadd %s400, 0
          %s409 = smul.addr %s21, 8
          %s410 = scalar_lea.hbm %s7, %s409
          %s412 = sshll.u32 %s403, 4
          %s413 = int_to_ptr.vmem [resolvable:$true] %s412
          %s414 = sshll.u32 %s410, 4
          %s415 = int_to_ptr.hbm [resolvable:$true] %s414
          %417 = dma.vmem_to_hbm [thread:$0]  %s413, 128, %s415, %s400
        $region52: #{variable_selection_network.1} parent=47 // pred_fallthru
          _
      $region48: #{variable_selection_network.1} parent=5 // pred_fallthru
        _
      %p418 = scmp.le.s32.totalorder 2, %s16
      // Predicated region
      $region53: #{variable_selection_network.1} parent=5 // pred_check
        %p419 = pneg %p418
      $region54: #{variable_selection_network.1} parent=5 // pred_check_branch
        %421 = sbr.rel (%p419) target = $region56
      $region55: #{variable_selection_network.1} parent=5 // pred_region
        %s422 = ssub.s32 %s16, 2
        // Predicated region
        $region57: #{variable_selection_network.1} parent=55 // pred_check
          %p423 = pneg %p197
        $region58: #{variable_selection_network.1} parent=55 // pred_check_branch
          %425 = sbr.rel (%p423) target = $region60
        $region59: #{variable_selection_network.1} parent=55 // pred_region
          %s426 = sand.u32 %s182, 1
          %s427 = scalar_lea.sflag [#allocation3], %s426
          %s428 = sand.u32 %s182, 1
          %s429 = smul.addr %s428, 8
          %s430 = scalar_lea.vmem [#allocation2], %s429
          %432 = dma.done %s427, 128
        $region60: #{variable_selection_network.1} parent=55 // pred_fallthru
          _
      $region56: #{variable_selection_network.1} parent=5 // pred_fallthru
        _
    $region6: #{variable_selection_network.1} parent=1 // loop_footer
      %s20 = sadd.s32 1, %s16
    $region7: #{variable_selection_network.1} parent=1 // loop_footer_branch
      %15 = sbr.rel target = $region3
    $region8: #{variable_selection_network.1} parent=1 // loop_exit
      _
    %433 = vsyncpa [#allocation3], 1
    %s434 = scalar_lea.sflag [#allocation3], 1
    %435 = vsyncpa %s434, 1

</llo_original>
